<compile_context>
chip_gen: v6e
topology: v6e:2x2x1
jax: 0.10.0
libtpu: 0.0.40
codegen_flags: <defaults>
</compile_context>

<pallas_src>
import functools

import jax
import jax.numpy as jnp
from jax.experimental import pallas as pl
from jax.experimental.pallas import tpu as pltpu


def _redunet_layer_kernel(z_ref, cs_rows_ref, w_all_ref, out_ref,
                          *, eta, inv_temp, c, d):
    """Grid = (n_tile, layer). out_ref is the resident per-tile accumulator."""
    l = pl.program_id(1)

    @pl.when(l == 0)
    def _():
        out_ref[...] = z_ref[...]

    Z = out_ref[...]                        # (d, tn)
    cs_rows = cs_rows_ref[0]                # (c*d, d)   = Cs[l] stacked over classes
    w_all = w_all_ref[0]                    # (d, (1+c)*d) = [E | -gamma_c * Cs_c]
    tn = Z.shape[1]

    # sims = -|| Cs[l] @ Z ||  over the feature dim  -> (c, tn)
    CZ = jnp.dot(cs_rows, Z, preferred_element_type=jnp.float32)   # (c*d, tn)
    sq = (CZ * CZ).reshape(c, d, tn)
    sims = -jnp.sqrt(jnp.sum(sq, axis=1))                          # (c, tn)

    # P_hat = softmax(sims / temperature, axis=0)
    logits = sims * inv_temp
    m = jnp.max(logits, axis=0, keepdims=True)
    ex = jnp.exp(logits - m)
    P_hat = ex * pl.reciprocal(jnp.sum(ex, axis=0, keepdims=True), approx=False)

    # grads = E@Z - sum_c gamma_c * Cs_c @ (P_hat_c * Z)
    #       = [E | -gamma_c*Cs_c] @ [Z ; P_hat_c*Z]   (single MXU matmul, K=(1+c)*d)
    PZ = (P_hat[:, None, :] * Z[None, :, :]).reshape(c * d, tn)
    X = jnp.concatenate([Z, PZ], axis=0)                           # ((1+c)*d, tn)
    grads = jnp.dot(w_all, X, preferred_element_type=jnp.float32)  # (d, tn)

    # Z = (Z + eta * grads) / column_L2_norm   (rsqrt on EUP; clamp guards
    # padded zero-columns against 0/0 without changing valid columns)
    Z_new = Z + eta * grads
    sumsq = jnp.sum(Z_new * Z_new, axis=0, keepdims=True)
    Z_new = Z_new * jax.lax.rsqrt(jnp.maximum(sumsq, 1e-30))
    out_ref[...] = Z_new


def simple_redunet_forward(Z, Es, Css, gamma, eta, temperature,
                           L=None, tile_n=256):
    """Pallas implementation of SimpleReduNet.forward(Z, P=None, L)."""
    # TODO(synk): only the P=None branch is implemented (P_hat from softmax);
    # a user-supplied P would just skip the sims/softmax block.
    total_L, d, _ = Es.shape
    c = Css.shape[1]
    n = Z.shape[1]
    if L is None:
        L = total_L

    Z = Z.astype(jnp.float32)
    Es = Es.astype(jnp.float32)[:L]
    Css = Css.astype(jnp.float32)[:L]
    gamma = gamma.astype(jnp.float32)

    # --- weight prep (wrapper-side, once) -----------------------------------
    # Row-stacked Cs for the sims matmul: (L, c*d, d)
    cs_rows = Css.reshape(L, c * d, d)
    # gamma-folded, block-concatenated compress weight: (L, d, c*d)
    w_comp = gamma[None, :, None, None] * Css                     # (L, c, d, d)
    w_comp = jnp.transpose(w_comp, (0, 2, 1, 3)).reshape(L, d, c * d)
    # Fused [E | -gamma*Cs] weight: (L, d, (1+c)*d)
    w_all = jnp.concatenate([Es, -w_comp], axis=2)

    # --- lane-dense column tiling (pad n to a multiple of the tile) ---------
    tn = min(int(tile_n), ((n + 127) // 128) * 128)
    tn = max(128, (tn // 128) * 128)
    n_pad = ((n + tn - 1) // tn) * tn
    if n_pad != n:
        Z = jnp.pad(Z, ((0, 0), (0, n_pad - n)))
    n_tiles = n_pad // tn

    kernel = functools.partial(_redunet_layer_kernel,
                               eta=float(eta),
                               inv_temp=1.0 / float(temperature),
                               c=int(c), d=int(d))

    out = pl.pallas_call(
        kernel,
        out_shape=jax.ShapeDtypeStruct((d, n_pad), jnp.float32),
        grid_spec=pltpu.PrefetchScalarGridSpec(
            num_scalar_prefetch=0,
            grid=(n_tiles, L),
            in_specs=[
                pl.BlockSpec((d, tn), lambda i, l: (0, i)),                # Z tile
                pl.BlockSpec((1, c * d, d), lambda i, l: (l, 0, 0)),       # Cs rows
                pl.BlockSpec((1, d, (1 + c) * d), lambda i, l: (l, 0, 0)),  # fused W
            ],
            out_specs=pl.BlockSpec((d, tn), lambda i, l: (0, i)),
        ),
        compiler_params=pltpu.CompilerParams(
            dimension_semantics=("parallel", "arbitrary")),
    )(Z, cs_rows, w_all)

    return out[:, :n] if n_pad != n else out


def _ref_forward(Z, Es, Css, gamma, eta, temperature):
    """Pure-JAX reference mirroring the PyTorch forward."""
    L = Es.shape[0]
    for l in range(L):
        CZ = jnp.einsum('cij,jn->cin', Css[l], Z)
        sims = -jnp.sqrt(jnp.sum(CZ * CZ, axis=1))
        P_hat = jax.nn.softmax(sims / temperature, axis=0)
        PZ = P_hat[:, None, :] * Z[None, :, :]
        CPZ = jnp.einsum('cij,cjn->cin', Css[l], PZ)
        grads = Es[l] @ Z - jnp.einsum('c,cin->in', gamma, CPZ)
        Z = Z + eta * grads
        Z = Z / jnp.linalg.norm(Z, axis=0, keepdims=True)
    return Z


if __name__ == "__main__":
    # Small deterministic synthetic setup (build()/coding_rate_grads is a
    # training-time construction; E/Cs are initialized directly here).
    # n=320 exercises both the parallel column-tile axis and the padding path.
    L, c, d, n = 3, 4, 32, 320
    key = jax.random.PRNGKey(0)
    k1, k2, k3, k4 = jax.random.split(key, 4)

    Z0 = jax.random.normal(k1, (d, n), dtype=jnp.float32)
    Z0 = Z0 / jnp.linalg.norm(Z0, axis=0, keepdims=True)   # column-normalized
    Es = 0.1 * jax.random.normal(k2, (L, d, d), dtype=jnp.float32)
    Css = 0.1 * jax.random.normal(k3, (L, c, d, d), dtype=jnp.float32)
    gamma = jax.nn.softmax(jax.random.normal(k4, (c,), dtype=jnp.float32))
    eta = 0.5
    temperature = 0.1

    out = simple_redunet_forward(Z0, Es, Css, gamma, eta, temperature,
                                 tile_n=128)
    out = jax.block_until_ready(out)

    ref = _ref_forward(Z0, Es, Css, gamma, eta, temperature)
    assert out.shape == (d, n) and out.dtype == jnp.float32
    err = float(jnp.max(jnp.abs(out - ref)))
    assert jnp.allclose(out, ref, atol=1e-4, rtol=1e-4), err
    print("KERNEL_OK")
</pallas_src>

<mosaic_0001>
module attributes {stable_mosaic.version = 11 : i64} {
  func.func @_redunet_layer_kernel(%arg0: i32, %arg1: i32, %arg2: memref<32x128xf32, #tpu.memory_space<vmem>>, %arg3: memref<1x128x32xf32, #tpu.memory_space<vmem>>, %arg4: memref<1x32x160xf32, #tpu.memory_space<vmem>>, %arg5: memref<32x128xf32, #tpu.memory_space<vmem>>) attributes {dimension_semantics = [#tpu.dimension_semantics<parallel>, #tpu.dimension_semantics<arbitrary>], iteration_bounds = array<i64: 3, 3>, scalar_prefetch = 0 : i64, scratch_operands = 0 : i64, tpu.core_type = #tpu.core_type<tc>, window_params = [{transform_indices = @transform_0, window_bounds = array<i64: 32, 128>}, {transform_indices = @transform_1, window_bounds = array<i64: 1, 128, 32>}, {transform_indices = @transform_2, window_bounds = array<i64: 1, 32, 160>}, {transform_indices = @transform_3, window_bounds = array<i64: 32, 128>}]} {
    %c0_i32 = arith.constant 0 : i32
    %0 = arith.cmpi eq, %arg1, %c0_i32 : i32
    %1 = arith.extui %0 : i1 to i32
    %c0_i32_0 = arith.constant 0 : i32
    %2 = arith.cmpi ne, %1, %c0_i32_0 : i32
    scf.if %2 {
      %c0_19 = arith.constant 0 : index
      %c0_20 = arith.constant 0 : index
      %47 = vector.load %arg2[%c0_19, %c0_20] : memref<32x128xf32, #tpu.memory_space<vmem>>, vector<32x128xf32>
      %c0_21 = arith.constant 0 : index
      %c0_22 = arith.constant 0 : index
      %48 = vector.load %arg5[%c0_21, %c0_22] : memref<32x128xf32, #tpu.memory_space<vmem>>, vector<32x128xf32>
      tpu.vector_store %arg5[%c0_21, %c0_22], %47 {strides = array<i32>} : memref<32x128xf32, #tpu.memory_space<vmem>>, vector<32x128xf32>,
    } else {
    }
    %c0 = arith.constant 0 : index
    %c0_1 = arith.constant 0 : index
    %3 = vector.load %arg5[%c0, %c0_1] : memref<32x128xf32, #tpu.memory_space<vmem>>, vector<32x128xf32>
    %c0_2 = arith.constant 0 : index
    %c0_3 = arith.constant 0 : index
    %c0_4 = arith.constant 0 : index
    %4 = vector.load %arg3[%c0_2, %c0_3, %c0_4] : memref<1x128x32xf32, #tpu.memory_space<vmem>>, vector<1x128x32xf32>
    %5 = vector.shape_cast %4 : vector<1x128x32xf32> to vector<128x32xf32>
    %c0_5 = arith.constant 0 : index
    %c0_6 = arith.constant 0 : index
    %c0_7 = arith.constant 0 : index
    %6 = vector.load %arg4[%c0_5, %c0_6, %c0_7] : memref<1x32x160xf32, #tpu.memory_space<vmem>>, vector<1x32x160xf32>
    %7 = vector.shape_cast %6 : vector<1x32x160xf32> to vector<32x160xf32>
    %cst = arith.constant dense<0.000000e+00> : vector<128x128xf32>
    %8 = tpu.matmul %5, %3, %cst {dimension_numbers = #tpu.dot_dimension_numbers<[1], [0], [0], [1], [0, 0, 1, 1], [], []>} : vector<128x32xf32>, vector<32x128xf32>, vector<128x128xf32> -> vector<128x128xf32>
    %9 = arith.mulf %8, %8 : vector<128x128xf32>
    %10 = vector.shape_cast %9 : vector<128x128xf32> to vector<4x32x128xf32>
    %cst_8 = arith.constant dense<0.000000e+00> : vector<4x128xf32>
    %11 = vector.multi_reduction <add>, %10, %cst_8 [1] : vector<4x32x128xf32> to vector<4x128xf32>
    %12 = math.sqrt %11 : vector<4x128xf32>
    %cst_9 = arith.constant 0.000000e+00 : f32
    %13 = vector.broadcast %cst_9 : f32 to vector<4x128xf32>
    %14 = arith.subf %13, %12 : vector<4x128xf32>
    %cst_10 = arith.constant 1.000000e+01 : f32
    %15 = vector.broadcast %cst_10 : f32 to vector<4x128xf32>
    %16 = arith.mulf %14, %15 : vector<4x128xf32>
    %cst_11 = arith.constant dense<0xFF800000> : vector<128xf32>
    %17 = vector.multi_reduction <maximumf>, %16, %cst_11 [0] : vector<4x128xf32> to vector<128xf32>
    %18 = vector.shape_cast %17 : vector<128xf32> to vector<1x128xf32>
    %19 = vector.broadcast %18 : vector<1x128xf32> to vector<4x128xf32>
    %20 = arith.subf %16, %19 : vector<4x128xf32>
    %21 = math.exp %20 : vector<4x128xf32>
    %cst_12 = arith.constant dense<0.000000e+00> : vector<128xf32>
    %22 = vector.multi_reduction <add>, %21, %cst_12 [0] : vector<4x128xf32> to vector<128xf32>
    %23 = vector.shape_cast %22 : vector<128xf32> to vector<1x128xf32>
    %24 = tpu.reciprocal %23 : vector<1x128xf32> -> vector<1x128xf32>
    %25 = vector.broadcast %24 : vector<1x128xf32> to vector<4x128xf32>
    %26 = arith.mulf %21, %25 : vector<4x128xf32>
    %27 = vector.shape_cast %26 : vector<4x128xf32> to vector<4x1x128xf32>
    %28 = vector.shape_cast %3 : vector<32x128xf32> to vector<1x32x128xf32>
    %29 = vector.broadcast %27 : vector<4x1x128xf32> to vector<4x32x128xf32>
    %30 = vector.broadcast %28 : vector<1x32x128xf32> to vector<4x32x128xf32>
    %31 = arith.mulf %29, %30 : vector<4x32x128xf32>
    %32 = vector.shape_cast %31 : vector<4x32x128xf32> to vector<128x128xf32>
    %33 = tpu.concatenate %3, %32 in 0 : vector<32x128xf32>, vector<128x128xf32> -> vector<160x128xf32>
    %cst_13 = arith.constant dense<0.000000e+00> : vector<32x128xf32>
    %34 = tpu.matmul %7, %33, %cst_13 {dimension_numbers = #tpu.dot_dimension_numbers<[1], [0], [0], [1], [0, 0, 1, 1], [], []>} : vector<32x160xf32>, vector<160x128xf32>, vector<32x128xf32> -> vector<32x128xf32>
    %cst_14 = arith.constant 5.000000e-01 : f32
    %35 = vector.broadcast %cst_14 : f32 to vector<32x128xf32>
    %36 = arith.mulf %35, %34 : vector<32x128xf32>
    %37 = arith.addf %3, %36 : vector<32x128xf32>
    %38 = arith.mulf %37, %37 : vector<32x128xf32>
    %cst_15 = arith.constant dense<0.000000e+00> : vector<128xf32>
    %39 = vector.multi_reduction <add>, %38, %cst_15 [0] : vector<32x128xf32> to vector<128xf32>
    %40 = vector.shape_cast %39 : vector<128xf32> to vector<1x128xf32>
    %cst_16 = arith.constant 1.000000e-30 : f32
    %41 = vector.broadcast %cst_16 : f32 to vector<1x128xf32>
    %42 = arith.maximumf %40, %41 : vector<1x128xf32>
    %43 = math.rsqrt %42 : vector<1x128xf32>
    %44 = vector.broadcast %43 : vector<1x128xf32> to vector<32x128xf32>
    %45 = arith.mulf %37, %44 : vector<32x128xf32>
    %c0_17 = arith.constant 0 : index
    %c0_18 = arith.constant 0 : index
    %46 = vector.load %arg5[%c0_17, %c0_18] : memref<32x128xf32, #tpu.memory_space<vmem>>, vector<32x128xf32>
    tpu.vector_store %arg5[%c0_17, %c0_18], %45 {strides = array<i32>} : memref<32x128xf32, #tpu.memory_space<vmem>>, vector<32x128xf32>,
    return
  }
  func.func @transform_0(%arg0: i32, %arg1: i32) -> (i32, i32) {
    %c0_i32 = arith.constant 0 : i32
    %c0_i32_0 = arith.constant 0 : i32
    return %c0_i32, %arg0 : i32, i32
  }
  func.func @transform_1(%arg0: i32, %arg1: i32) -> (i32, i32, i32) {
    %c0_i32 = arith.constant 0 : i32
    %c0_i32_0 = arith.constant 0 : i32
    %c0_i32_1 = arith.constant 0 : i32
    return %arg1, %c0_i32, %c0_i32_0 : i32, i32, i32
  }
  func.func @transform_2(%arg0: i32, %arg1: i32) -> (i32, i32, i32) {
    %c0_i32 = arith.constant 0 : i32
    %c0_i32_0 = arith.constant 0 : i32
    %c0_i32_1 = arith.constant 0 : i32
    return %arg1, %c0_i32, %c0_i32_0 : i32, i32, i32
  }
  func.func @transform_3(%arg0: i32, %arg1: i32) -> (i32, i32) {
    %c0_i32 = arith.constant 0 : i32
    %c0_i32_0 = arith.constant 0 : i32
    return %c0_i32, %arg0 : i32, i32
  }
}

</mosaic_0001>

<llo_original>
// kernel: tpu_custom_call.1
$region0: #{tpu_custom_call.1}
  #allocation0 [shape = 'u32[]', space=smem, size = 0x4, offset = 0x4, fixed_abs, tag = 'smem constant byte address 0x4 - core index']
  #allocation1 [shape = 'u32[144,128]{1,0:T(1,128)}', space=vmem, size = 0x12000, scoped, tag = 'internal scratch']
  %s0 = inlined_call_operand.vmem [shape: f32[32,384], index: 0, kind: input, shape index: {}]
  %s1 = inlined_call_operand.vmem [shape: f32[3,128,32], index: 1, kind: input, shape index: {}]
  %s2 = inlined_call_operand.vmem [shape: f32[3,32,160], index: 2, kind: input, shape index: {}]
  %s3 = inlined_call_operand.hbm [shape: f32[32,384], index: 3, kind: output, shape index: {}]
  %s4 = sld [smem:[#allocation0]]
  $region87: #{tpu_custom_call.1} parent=0
    _
  %s6 = ssub.s32 1, %s4
  %s7 = scalar_select 0, %s6, %s4
  $region1: #{tpu_custom_call.1} parent=0
    #allocation2 [shape = 'u8[32768]{0}', space=vmem, size = 0x8000, scoped, tag = 'input window, operand 0']
    #allocation3 [shape = 'u8[32768]{0}', space=vmem, size = 0x8000, scoped, tag = 'output window, operand 0']
    #allocation4 [shape = 's32[2]{0}', space=sflag, size = 0x8, scoped, tag = 'scoped memory for tpu_custom_call.1']
    %8 = vsyncpa [#allocation4], 0
    %s9 = scalar_lea.sflag [#allocation4], 1
    %10 = vsyncpa %s9, 0
    loop: start=0, step=1, limit=11
    $region2: #{tpu_custom_call.1} parent=1 // loop_pre_header
      _
    $region3: #{tpu_custom_call.1} parent=1 // loop_header
      %s12 = sphi 0, %s16
      %p13 = scmp.ge.s32.totalorder %s12, 11
      %s19 = sphi 0, %s31
      %s20 = sphi 0, %s27
      %s21 = sphi 0, %s19
      %s22 = sphi 0, %s20
      %s23 = sphi 0, %s21
      %s24 = sphi 0, %s22
      %s34 = sphi 0, %s36
      %s37 = sphi 0, %s34
      %s38 = sphi 0, %s37
      %s54 = sphi 0, %s38
      %s60 = sphi 0, %s62
      %s63 = sphi 0, %s60
      %s64 = sphi 0, %s63
      %s80 = sphi 0, %s64
      %s86 = sphi 0, %s88
      %s89 = sphi 0, %s86
      %s90 = sphi 0, %s89
      %s106 = sphi 0, %s90
      %s112 = sphi 0, %s114
      %s115 = sphi 0, %s112
      %s116 = sphi 0, %s115
      %s132 = sphi 0, %s116
    $region4: #{tpu_custom_call.1} parent=1 // loop_header_branch
      %15 = sbr.rel (%p13) target = $region8
    $region5: #{tpu_custom_call.1} parent=1 // loop_body
      %s17 = ssub.s32 %s12, 1
      %s18 = ssub.s32 %s12, 2
      %s25 = sadd.s32 1, %s20
      %p26 = scmp.ge.s32.totalorder %s25, 3
      %s27 = scalar_select %p26, 0, %s25
      %s28 = sadd.s32 1, %s19
      %s29 = scalar_select %p26, %s28, %s19
      %p30 = scmp.ge.s32.totalorder %s29, 3
      %s31 = scalar_select %p30, 0, %s29
      %s32 = ssub.s32 %s19, %s31
      %p33 = scmp.eq.s32.totalorder %s32, 0
      %s35 = sadd.s32 %s34, 1
      %s36 = scalar_select %p33, %s34, %s35
      %p39 = pneg %p33
      %p40 = scmp.eq.s32.totalorder %s12, 8
      %p41 = por %p39, %p40
      %p42 = scmp.ne.s32.totalorder %s34, %s37
      %p43 = scmp.eq.s32.totalorder %s12, 0
      %p44 = por %p42, %p43
      %p45 = scmp.ne.s32.totalorder %s34, %s37
      %p46 = scmp.eq.s32.totalorder %s17, 8
      %p47 = por %p45, %p46
      %p48 = scmp.ne.s32.totalorder %s37, %s38
      %p49 = scmp.eq.s32.totalorder %s17, 0
      %p50 = por %p48, %p49
      %p51 = scmp.ne.s32.totalorder %s37, %s38
      %p52 = scmp.eq.s32.totalorder %s18, 8
      %p53 = por %p51, %p52
      %p55 = scmp.ne.s32.totalorder %s38, %s54
      %p56 = scmp.eq.s32.totalorder %s18, 0
      %p57 = por %p55, %p56
      %s58 = ssub.s32 %s20, %s27
      %p59 = scmp.eq.s32.totalorder %s58, 0
      %s61 = sadd.s32 %s60, 1
      %s62 = scalar_select %p59, %s60, %s61
      %p65 = pneg %p59
      %p66 = scmp.eq.s32.totalorder %s12, 8
      %p67 = por %p65, %p66
      %p68 = scmp.ne.s32.totalorder %s60, %s63
      %p69 = scmp.eq.s32.totalorder %s12, 0
      %p70 = por %p68, %p69
      %p71 = scmp.ne.s32.totalorder %s60, %s63
      %p72 = scmp.eq.s32.totalorder %s17, 8
      %p73 = por %p71, %p72
      %p74 = scmp.ne.s32.totalorder %s63, %s64
      %p75 = scmp.eq.s32.totalorder %s17, 0
      %p76 = por %p74, %p75
      %p77 = scmp.ne.s32.totalorder %s63, %s64
      %p78 = scmp.eq.s32.totalorder %s18, 8
      %p79 = por %p77, %p78
      %p81 = scmp.ne.s32.totalorder %s64, %s80
      %p82 = scmp.eq.s32.totalorder %s18, 0
      %p83 = por %p81, %p82
      %s84 = ssub.s32 %s20, %s27
      %p85 = scmp.eq.s32.totalorder %s84, 0
      %s87 = sadd.s32 %s86, 1
      %s88 = scalar_select %p85, %s86, %s87
      %p91 = pneg %p85
      %p92 = scmp.eq.s32.totalorder %s12, 8
      %p93 = por %p91, %p92
      %p94 = scmp.ne.s32.totalorder %s86, %s89
      %p95 = scmp.eq.s32.totalorder %s12, 0
      %p96 = por %p94, %p95
      %p97 = scmp.ne.s32.totalorder %s86, %s89
      %p98 = scmp.eq.s32.totalorder %s17, 8
      %p99 = por %p97, %p98
      %p100 = scmp.ne.s32.totalorder %s89, %s90
      %p101 = scmp.eq.s32.totalorder %s17, 0
      %p102 = por %p100, %p101
      %p103 = scmp.ne.s32.totalorder %s89, %s90
      %p104 = scmp.eq.s32.totalorder %s18, 8
      %p105 = por %p103, %p104
      %p107 = scmp.ne.s32.totalorder %s90, %s106
      %p108 = scmp.eq.s32.totalorder %s18, 0
      %p109 = por %p107, %p108
      %s110 = ssub.s32 %s19, %s31
      %p111 = scmp.eq.s32.totalorder %s110, 0
      %s113 = sadd.s32 %s112, 1
      %s114 = scalar_select %p111, %s112, %s113
      %p117 = pneg %p111
      %p118 = scmp.eq.s32.totalorder %s12, 8
      %p119 = por %p117, %p118
      %p120 = scmp.ne.s32.totalorder %s112, %s115
      %p121 = scmp.eq.s32.totalorder %s12, 0
      %p122 = por %p120, %p121
      %p123 = scmp.ne.s32.totalorder %s112, %s115
      %p124 = scmp.eq.s32.totalorder %s17, 8
      %p125 = por %p123, %p124
      %p126 = scmp.ne.s32.totalorder %s115, %s116
      %p127 = scmp.eq.s32.totalorder %s17, 0
      %p128 = por %p126, %p127
      %p129 = scmp.ne.s32.totalorder %s115, %s116
      %p130 = scmp.eq.s32.totalorder %s18, 8
      %p131 = por %p129, %p130
      %p133 = scmp.ne.s32.totalorder %s116, %s132
      %p134 = scmp.eq.s32.totalorder %s18, 0
      %p135 = por %p133, %p134
      %p136 = scmp.le.s32.totalorder 1, %s12
      %p137 = scmp.lt.s32.totalorder %s12, 10
      %p138 = pnand %p136, %p137
      %p139 = pneg %p138
      // Predicated region
      $region9: #{tpu_custom_call.1} parent=5 // pred_check
        _
      $region10: #{tpu_custom_call.1} parent=5 // pred_check_branch
        %141 = sbr.rel (%p138) target = $region12
      $region11: #{tpu_custom_call.1} parent=5 // pred_region
        %s142 = ssub.s32 %s12, 1
      $region12: #{tpu_custom_call.1} parent=5 // pred_fallthru
        _
      %p143 = scmp.lt.s32.totalorder %s12, 9
      // Predicated region
      $region13: #{tpu_custom_call.1} parent=5 // pred_check
        %p144 = pneg %p143
      $region14: #{tpu_custom_call.1} parent=5 // pred_check_branch
        %146 = sbr.rel (%p144) target = $region16
      $region15: #{tpu_custom_call.1} parent=5 // pred_region
        // Predicated region
        $region17: #{tpu_custom_call.1} parent=15 // pred_check
          %p147 = pneg %p44
        $region18: #{tpu_custom_call.1} parent=15 // pred_check_branch
          %149 = sbr.rel (%p147) target = $region20
        $region19: #{tpu_custom_call.1} parent=15 // pred_region
          %s150 = sand.u32 %s34, 1
          %s151 = sand.u32 %s34, 1
          %s152 = smul.addr %s151, 32
          %s153 = scalar_lea.vmem [#allocation2], %s152
          %s154 = smul.addr %s19, 8
          %s155 = scalar_lea.vmem %s0, %s154
          // Predicated region
          $region21: #{tpu_custom_call.1} parent=19 // pred_check
            _
          $region22: #{tpu_custom_call.1} parent=19 // pred_check_branch
            %157 = sbr.rel (0) target = $region24
          $region23: #{tpu_custom_call.1} parent=19 // pred_region
            // Predicated region
            $region25: #{tpu_custom_call.1} parent=23 // pred_check
              _
            $region26: #{tpu_custom_call.1} parent=23 // pred_check_branch
              %159 = sbr.rel (0) target = $region28
            $region27: #{tpu_custom_call.1} parent=23 // pred_region
              // Predicated region
              $region40: #{tpu_custom_call.1} parent=27 // pred_check
                _
              $region41: #{tpu_custom_call.1} parent=27 // pred_check_branch
                %181 = sbr.rel (0) target = $region43
              $region42: #{tpu_custom_call.1} parent=27 // pred_region
                loop: start=0, step=1, limit=1
                $region44: #{tpu_custom_call.1} parent=42 // loop_pre_header
                  _
                $region45: #{tpu_custom_call.1} parent=42 // loop_header
                  %s183 = sphi 0, %s187
                  %p184 = scmp.ge.s32.totalorder %s183, 1
                  %s188 = sphi %s155, %s155
                  %s189 = sphi %s153, %s153
                $region46: #{tpu_custom_call.1} parent=42 // loop_header_branch
                  %186 = sbr.rel (%p184) target = $region50
                $region47: #{tpu_custom_call.1} parent=42 // loop_body
                  %v190 = vld [vmem:[%s188] sm:$0xff]
                  %191 = vst [vmem:[%s189] sm:$0xff] %v190
                  %v192 = vld [vmem:[%s188 + $0x18] sm:$0xff]
                  %193 = vst [vmem:[%s189 + $0x8] sm:$0xff] %v192
                  %v194 = vld [vmem:[%s188 + $0x30] sm:$0xff]
                  %195 = vst [vmem:[%s189 + $0x10] sm:$0xff] %v194
                  %v196 = vld [vmem:[%s188 + $0x48] sm:$0xff]
                  %197 = vst [vmem:[%s189 + $0x18] sm:$0xff] %v196
                $region48: #{tpu_custom_call.1} parent=42 // loop_footer
                  %s187 = sadd.s32 1, %s183
                $region49: #{tpu_custom_call.1} parent=42 // loop_footer_branch
                  %182 = sbr.rel target = $region45
                $region50: #{tpu_custom_call.1} parent=42 // loop_exit
                  _
              $region43: #{tpu_custom_call.1} parent=27 // pred_fallthru
                _
              // Predicated region
              $region51: #{tpu_custom_call.1} parent=27 // pred_check
                _
              $region52: #{tpu_custom_call.1} parent=27 // pred_check_branch
                %199 = sbr.rel target = $region54
              $region53: #{tpu_custom_call.1} parent=27 // pred_region
                _
              $region54: #{tpu_custom_call.1} parent=27 // pred_fallthru
                _
            $region28: #{tpu_custom_call.1} parent=23 // pred_fallthru
              _
            // Predicated region
            $region29: #{tpu_custom_call.1} parent=23 // pred_check
              _
            $region30: #{tpu_custom_call.1} parent=23 // pred_check_branch
              %161 = sbr.rel target = $region32
            $region31: #{tpu_custom_call.1} parent=23 // pred_region
              %s163 = ssub.s32 256, 1
              loop: start=0, step=1, limit=1
              $region33: #{tpu_custom_call.1} parent=31 // loop_pre_header
                _
              $region34: #{tpu_custom_call.1} parent=31 // loop_header
                %s165 = sphi 0, %s169
                %p166 = scmp.ge.s32.totalorder %s165, 1
                %s170 = sphi %s155, %s155
                %s171 = sphi %s153, %s153
              $region35: #{tpu_custom_call.1} parent=31 // loop_header_branch
                %168 = sbr.rel (%p166) target = $region39
              $region36: #{tpu_custom_call.1} parent=31 // loop_body
                %v172 = vld [vmem:[%s170] sm:%s163]
                %173 = vst [vmem:[%s171] sm:%s163] %v172
                %v174 = vld [vmem:[%s170 + $0x18] sm:%s163]
                %175 = vst [vmem:[%s171 + $0x8] sm:%s163] %v174
                %v176 = vld [vmem:[%s170 + $0x30] sm:%s163]
                %177 = vst [vmem:[%s171 + $0x10] sm:%s163] %v176
                %v178 = vld [vmem:[%s170 + $0x48] sm:%s163]
                %179 = vst [vmem:[%s171 + $0x18] sm:%s163] %v178
              $region37: #{tpu_custom_call.1} parent=31 // loop_footer
                %s169 = sadd.s32 1, %s165
              $region38: #{tpu_custom_call.1} parent=31 // loop_footer_branch
                %164 = sbr.rel target = $region34
              $region39: #{tpu_custom_call.1} parent=31 // loop_exit
                _
            $region32: #{tpu_custom_call.1} parent=23 // pred_fallthru
              _
          $region24: #{tpu_custom_call.1} parent=19 // pred_fallthru
            _
          %200 = vnop
        $region20: #{tpu_custom_call.1} parent=15 // pred_fallthru
          _
        // Predicated region
        $region55: #{tpu_custom_call.1} parent=15 // pred_check
          %p201 = pneg %p70
        $region56: #{tpu_custom_call.1} parent=15 // pred_check_branch
          %203 = sbr.rel (%p201) target = $region58
        $region57: #{tpu_custom_call.1} parent=15 // pred_region
          %p204 = scmp.lt.s32.totalorder %s20, 2
          %s205 = scalar_select %p204, %s20, 2
          %s206 = smul.addr %s205, 16
          %s207 = smul.addr %s206, 8
          %s208 = scalar_lea.vmem %s1, %s207
        $region58: #{tpu_custom_call.1} parent=15 // pred_fallthru
          _
        // Predicated region
        $region59: #{tpu_custom_call.1} parent=15 // pred_check
          %p209 = pneg %p96
        $region60: #{tpu_custom_call.1} parent=15 // pred_check_branch
          %211 = sbr.rel (%p209) target = $region62
        $region61: #{tpu_custom_call.1} parent=15 // pred_region
          %p212 = scmp.lt.s32.totalorder %s20, 2
          %s213 = scalar_select %p212, %s20, 2
          %s214 = smul.addr %s213, 8
          %s215 = smul.addr %s214, 8
          %s216 = scalar_lea.vmem %s2, %s215
        $region62: #{tpu_custom_call.1} parent=15 // pred_fallthru
          _
      $region16: #{tpu_custom_call.1} parent=5 // pred_fallthru
        _
      %p217 = scmp.le.s32.totalorder 1, %s12
      %p218 = scmp.lt.s32.totalorder %s12, 10
      %p219 = pnand %p217, %p218
      %p220 = pneg %p219
      // Predicated region
      $region63: #{tpu_custom_call.1} parent=5 // pred_check
        _
      $region64: #{tpu_custom_call.1} parent=5 // pred_check_branch
        %222 = sbr.rel (%p219) target = $region66
      $region65: #{tpu_custom_call.1} parent=5 // pred_region
        %s223 = ssub.s32 %s12, 1
        %s224 = sand.u32 %s37, 1
        %s225 = sand.u32 %s37, 1
        %s226 = smul.addr %s225, 32
        %s227 = scalar_lea.vmem [#allocation2], %s226
        // Predicated region
        $region67: #{tpu_custom_call.1} parent=65 // pred_check
          %p228 = pneg %p50
        $region68: #{tpu_custom_call.1} parent=65 // pred_check_branch
          %230 = sbr.rel (%p228) target = $region70
        $region69: #{tpu_custom_call.1} parent=65 // pred_region
          _
        $region70: #{tpu_custom_call.1} parent=65 // pred_fallthru
          _
        %s231 = sand.u32 %s37, 1
        %s232 = sand.u32 %s37, 1
        %s233 = smul.addr %s232, 32
        %s234 = scalar_lea.vmem [#allocation2], %s233
        %p235 = pneg %p50
        %p236 = pneg %p47
        %p237 = scmp.lt.s32.totalorder %s22, 2
        %s238 = scalar_select %p237, %s22, 2
        %s239 = smul.addr %s238, 16
        %s240 = smul.addr %s239, 8
        %s241 = scalar_lea.vmem %s1, %s240
        %p242 = pneg %p76
        %p243 = pneg %p73
        %p244 = scmp.lt.s32.totalorder %s22, 2
        %s245 = scalar_select %p244, %s22, 2
        %s246 = smul.addr %s245, 8
        %s247 = smul.addr %s246, 8
        %s248 = scalar_lea.vmem %s2, %s247
        %p249 = pneg %p102
        %p250 = pneg %p99
        %p251 = pneg %p128
        %p252 = pneg %p125
        %s253 = sand.u32 %s115, 1
        %s254 = scalar_lea.sflag [#allocation4], %s253
        %s255 = sand.u32 %s115, 1
        %s256 = smul.addr %s255, 32
        %s257 = scalar_lea.vmem [#allocation3], %s256
        %p258 = scmp.lt.s32.totalorder %s22, 2
        %s259 = scalar_select %p258, %s22, 2
        %s260 = smul.addr %s259, 16
        %s261 = smul.addr %s260, 8
        %s262 = scalar_lea.vmem %s1, %s261
        %p263 = scmp.lt.s32.totalorder %s22, 2
        %s264 = scalar_select %p263, %s22, 2
        %s265 = smul.addr %s264, 8
        %s266 = smul.addr %s265, 8
        %s267 = scalar_lea.vmem %s2, %s266
        %p268 = scmp.eq.s32.totalorder %s22, 0
        // Predicated region
        $region71: #{tpu_custom_call.1} parent=65 // pred_check
          %p269 = pneg %p268
        $region72: #{tpu_custom_call.1} parent=65 // pred_check_branch
          %271 = sbr.rel (%p269) target = $region74
        $region73: #{tpu_custom_call.1} parent=65 // pred_region
          %v272 = vld [vmem:[%s227] sm:$0xff]
          %v273 = vld [vmem:[%s227 + $0x8] sm:$0xff]
          %v274 = vld [vmem:[%s227 + $0x10] sm:$0xff]
          %v275 = vld [vmem:[%s227 + $0x18] sm:$0xff]
          %276 = vst [vmem:[%s257] sm:$0xff] %v272
          %277 = vst [vmem:[%s257 + $0x8] sm:$0xff] %v273
          %278 = vst [vmem:[%s257 + $0x10] sm:$0xff] %v274
          %279 = vst [vmem:[%s257 + $0x18] sm:$0xff] %v275
        $region74: #{tpu_custom_call.1} parent=65 // pred_fallthru
          _
        %v280 = vld [vmem:[%s257] sm:$0xff]
        %v281 = vld [vmem:[%s257 + $0x8] sm:$0xff]
        %v282 = vld [vmem:[%s257 + $0x10] sm:$0xff]
        %v283 = vld [vmem:[%s257 + $0x18] sm:$0xff]
        %v284 = vld [vmem:[%s262] sm:$0xff]
        %v285 = vld [vmem:[%s262 + $0x8] sm:$0xff]
        %v286 = vld [vmem:[%s262 + $0x10] sm:$0xff]
        %v287 = vld [vmem:[%s262 + $0x18] sm:$0xff]
        %v288 = vld [vmem:[%s262 + $0x20] sm:$0xff]
        %v289 = vld [vmem:[%s262 + $0x28] sm:$0xff]
        %v290 = vld [vmem:[%s262 + $0x30] sm:$0xff]
        %v291 = vld [vmem:[%s262 + $0x38] sm:$0xff]
        %v292 = vld [vmem:[%s262 + $0x40] sm:$0xff]
        %v293 = vld [vmem:[%s262 + $0x48] sm:$0xff]
        %v294 = vld [vmem:[%s262 + $0x50] sm:$0xff]
        %v295 = vld [vmem:[%s262 + $0x58] sm:$0xff]
        %v296 = vld [vmem:[%s262 + $0x60] sm:$0xff]
        %v297 = vld [vmem:[%s262 + $0x68] sm:$0xff]
        %v298 = vld [vmem:[%s262 + $0x70] sm:$0xff]
        %v299 = vld [vmem:[%s262 + $0x78] sm:$0xff]
        %v300 = vld [vmem:[%s267] sm:$0xff]
        %v301 = vld [vmem:[%s267 + $0x8] sm:$0xff]
        %v302 = vld [vmem:[%s267 + $0x10] sm:$0xff]
        %v303 = vld [vmem:[%s267 + $0x18] sm:$0xff]
        %v304 = vld [vmem:[%s267 + $0x20] sm:$0xff]
        %v305 = vld [vmem:[%s267 + $0x28] sm:$0xff]
        %v306 = vld [vmem:[%s267 + $0x30] sm:$0xff]
        %v307 = vld [vmem:[%s267 + $0x38] sm:$0xff]
        %vm308 = vcmask 261120
        %v310 = vsel %vm308, %v284, 0
        %v313 = vsel %vm308, %v285, 0
        %v316 = vsel %vm308, %v286, 0
        %v319 = vsel %vm308, %v287, 0
        %v322 = vsel %vm308, %v288, 0
        %v325 = vsel %vm308, %v289, 0
        %v328 = vsel %vm308, %v290, 0
        %v331 = vsel %vm308, %v291, 0
        %v334 = vsel %vm308, %v292, 0
        %v337 = vsel %vm308, %v293, 0
        %v340 = vsel %vm308, %v294, 0
        %v343 = vsel %vm308, %v295, 0
        %v346 = vsel %vm308, %v296, 0
        %v349 = vsel %vm308, %v297, 0
        %v352 = vsel %vm308, %v298, 0
        %v355 = vsel %vm308, %v299, 0
        %357 = vmatprep.subr.mxu0 0.0
        %358 = vmatpush1.msra.mxu0 0.0
        %359 = vmatprep.subr.mxu0 0.0
        %360 = vmatpush1.msra.mxu0 0.0
        %361 = vmatprep.subr.mxu0 0.0
        %362 = vmatpush1.msra.mxu0 0.0
        %363 = vmatprep.subr.mxu0 0.0
        %364 = vmatpush1.msra.mxu0 0.0
        %365 = vmatprep.subr.mxu0 0.0
        %366 = vmatpush1.msra.mxu0 0.0
        %367 = vmatprep.subr.mxu0 0.0
        %368 = vmatpush1.msra.mxu0 0.0
        %369 = vmatprep.subr.mxu0 0.0
        %370 = vmatpush1.msra.mxu0 0.0
        %371 = vmatprep.subr.mxu0 0.0
        %372 = vmatpush1.msra.mxu0 0.0
        %373 = vmatprep.subr.mxu0 0.0
        %374 = vmatpush1.msra.mxu0 0.0
        %375 = vmatprep.subr.mxu0 0.0
        %376 = vmatpush1.msra.mxu0 0.0
        %377 = vmatprep.subr.mxu0 0.0
        %378 = vmatpush1.msra.mxu0 0.0
        %379 = vmatprep.subr.mxu0 0.0
        %380 = vmatpush1.msra.mxu0 0.0
        %381 = vmatprep.subr.mxu0 0.0
        %382 = vmatpush1.msra.mxu0 %v283
        %383 = vmatprep.subr.mxu0 0.0
        %384 = vmatpush1.msra.mxu0 %v282
        %385 = vmatprep.subr.mxu0 0.0
        %386 = vmatpush1.msra.mxu0 %v281
        %387 = vmatprep.subr.mxu0 0.0
        %388 = vmatpush1.msra.mxu0 %v280
        %389 = vmatprep.subr.mxu0 0.0
        %390 = vmatpush2.msra.mxu0 0.0
        %391 = vmatprep.subr.mxu0 0.0
        %392 = vmatpush2.msra.mxu0 0.0
        %393 = vmatprep.subr.mxu0 0.0
        %394 = vmatpush2.msra.mxu0 0.0
        %395 = vmatprep.subr.mxu0 0.0
        %396 = vmatpush2.msra.mxu0 0.0
        %397 = vmatprep.subr.mxu0 0.0
        %398 = vmatpush2.msra.mxu0 0.0
        %399 = vmatprep.subr.mxu0 0.0
        %400 = vmatpush2.msra.mxu0 0.0
        %401 = vmatprep.subr.mxu0 0.0
        %402 = vmatpush2.msra.mxu0 0.0
        %403 = vmatprep.subr.mxu0 0.0
        %404 = vmatpush2.msra.mxu0 0.0
        %405 = vmatprep.subr.mxu0 0.0
        %406 = vmatpush2.msra.mxu0 0.0
        %407 = vmatprep.subr.mxu0 0.0
        %408 = vmatpush2.msra.mxu0 0.0
        %409 = vmatprep.subr.mxu0 0.0
        %410 = vmatpush2.msra.mxu0 0.0
        %411 = vmatprep.subr.mxu0 0.0
        %412 = vmatpush2.msra.mxu0 0.0
        %413 = vmatprep.subr.mxu0 0.0
        %414 = vmatpush2.msra.mxu0 0.0
        %415 = vmatprep.subr.mxu0 0.0
        %416 = vmatpush2.msra.mxu0 0.0
        %417 = vmatprep.subr.mxu0 0.0
        %418 = vmatpush2.msra.mxu0 0.0
        %419 = vmatprep.subr.mxu0 0.0
        %420 = vmatpush2.msra.mxu0 0.0
        %421 = vmatprep.mubr.f32.mxu0 0.0
        %422 = vmatmul.mubr.f32.gmra.mxu0 %v310
        %v423 = vpop.f32.mrf.mxu0
        %v424 = vadd.f32 0.0, %v423
        %v425 = vpop.f32.mrf.mxu0
        %426 = vmatprep.mubr.f32.mxu0 0.0
        %427 = vmatmul.mubr.f32.gmra.mxu0 %v313
        %v428 = vpop.f32.mrf.mxu0
        %v429 = vadd.f32 0.0, %v428
        %v430 = vpop.f32.mrf.mxu0
        %431 = vmatprep.mubr.f32.mxu0 0.0
        %432 = vmatmul.mubr.f32.gmra.mxu0 %v316
        %v433 = vpop.f32.mrf.mxu0
        %v434 = vadd.f32 0.0, %v433
        %v435 = vpop.f32.mrf.mxu0
        %436 = vmatprep.mubr.f32.mxu0 0.0
        %437 = vmatmul.mubr.f32.gmra.mxu0 %v319
        %v438 = vpop.f32.mrf.mxu0
        %v439 = vadd.f32 0.0, %v438
        %v440 = vpop.f32.mrf.mxu0
        %441 = vmatprep.mubr.f32.mxu0 0.0
        %442 = vmatmul.mubr.f32.gmra.mxu0 %v322
        %v443 = vpop.f32.mrf.mxu0
        %v444 = vadd.f32 0.0, %v443
        %v445 = vpop.f32.mrf.mxu0
        %446 = vmatprep.mubr.f32.mxu0 0.0
        %447 = vmatmul.mubr.f32.gmra.mxu0 %v325
        %v448 = vpop.f32.mrf.mxu0
        %v449 = vadd.f32 0.0, %v448
        %v450 = vpop.f32.mrf.mxu0
        %451 = vmatprep.mubr.f32.mxu0 0.0
        %452 = vmatmul.mubr.f32.gmra.mxu0 %v328
        %v453 = vpop.f32.mrf.mxu0
        %v454 = vadd.f32 0.0, %v453
        %v455 = vpop.f32.mrf.mxu0
        %456 = vmatprep.mubr.f32.mxu0 0.0
        %457 = vmatmul.mubr.f32.gmra.mxu0 %v331
        %v458 = vpop.f32.mrf.mxu0
        %v459 = vadd.f32 0.0, %v458
        %v460 = vpop.f32.mrf.mxu0
        %461 = vmatprep.mubr.f32.mxu0 0.0
        %462 = vmatmul.mubr.f32.gmra.mxu0 %v334
        %v463 = vpop.f32.mrf.mxu0
        %v464 = vadd.f32 0.0, %v463
        %v465 = vpop.f32.mrf.mxu0
        %466 = vmatprep.mubr.f32.mxu0 0.0
        %467 = vmatmul.mubr.f32.gmra.mxu0 %v337
        %v468 = vpop.f32.mrf.mxu0
        %v469 = vadd.f32 0.0, %v468
        %v470 = vpop.f32.mrf.mxu0
        %471 = vmatprep.mubr.f32.mxu0 0.0
        %472 = vmatmul.mubr.f32.gmra.mxu0 %v340
        %v473 = vpop.f32.mrf.mxu0
        %v474 = vadd.f32 0.0, %v473
        %v475 = vpop.f32.mrf.mxu0
        %476 = vmatprep.mubr.f32.mxu0 0.0
        %477 = vmatmul.mubr.f32.gmra.mxu0 %v343
        %v478 = vpop.f32.mrf.mxu0
        %v479 = vadd.f32 0.0, %v478
        %v480 = vpop.f32.mrf.mxu0
        %481 = vmatprep.mubr.f32.mxu0 0.0
        %482 = vmatmul.mubr.f32.gmra.mxu0 %v346
        %v483 = vpop.f32.mrf.mxu0
        %v484 = vadd.f32 0.0, %v483
        %v485 = vpop.f32.mrf.mxu0
        %486 = vmatprep.mubr.f32.mxu0 0.0
        %487 = vmatmul.mubr.f32.gmra.mxu0 %v349
        %v488 = vpop.f32.mrf.mxu0
        %v489 = vadd.f32 0.0, %v488
        %v490 = vpop.f32.mrf.mxu0
        %491 = vmatprep.mubr.f32.mxu0 0.0
        %492 = vmatmul.mubr.f32.gmra.mxu0 %v352
        %v493 = vpop.f32.mrf.mxu0
        %v494 = vadd.f32 0.0, %v493
        %v495 = vpop.f32.mrf.mxu0
        %496 = vmatprep.mubr.f32.mxu0 0.0
        %497 = vmatmul.mubr.f32.gmra.mxu0 %v355
        %v498 = vpop.f32.mrf.mxu0
        %v499 = vadd.f32 0.0, %v498
        %v500 = vpop.f32.mrf.mxu0
        %501 = vdwg.mxu0
        %v502 = vmul.f32 %v424, %v424
        %v503 = vmul.f32 %v429, %v429
        %v504 = vmul.f32 %v434, %v434
        %v505 = vmul.f32 %v439, %v439
        %v506 = vmul.f32 %v444, %v444
        %v507 = vmul.f32 %v449, %v449
        %v508 = vmul.f32 %v454, %v454
        %v509 = vmul.f32 %v459, %v459
        %v510 = vmul.f32 %v464, %v464
        %v511 = vmul.f32 %v469, %v469
        %v512 = vmul.f32 %v474, %v474
        %v513 = vmul.f32 %v479, %v479
        %v514 = vmul.f32 %v484, %v484
        %v515 = vmul.f32 %v489, %v489
        %v516 = vmul.f32 %v494, %v494
        %v517 = vmul.f32 %v499, %v499
        %v518 = vadd.f32 %v502, %v503
        %v519 = vadd.f32 %v518, %v504
        %v520 = vadd.f32 %v519, %v505
        %v521 = vrot.slane %v520, 4
        %v522 = vadd.f32 %v520, %v521
        %v523 = vrot.slane %v522, 2
        %v524 = vadd.f32 %v522, %v523
        %v525 = vrot.slane %v524, 1
        %v526 = vadd.f32 %v524, %v525
        %v527 = vadd.f32 %v506, %v507
        %v528 = vadd.f32 %v527, %v508
        %v529 = vadd.f32 %v528, %v509
        %v530 = vrot.slane %v529, 4
        %v531 = vadd.f32 %v529, %v530
        %v532 = vrot.slane %v531, 2
        %v533 = vadd.f32 %v531, %v532
        %v534 = vrot.slane %v533, 1
        %v535 = vadd.f32 %v533, %v534
        %v536 = vadd.f32 %v510, %v511
        %v537 = vadd.f32 %v536, %v512
        %v538 = vadd.f32 %v537, %v513
        %v539 = vrot.slane %v538, 4
        %v540 = vadd.f32 %v538, %v539
        %v541 = vrot.slane %v540, 2
        %v542 = vadd.f32 %v540, %v541
        %v543 = vrot.slane %v542, 1
        %v544 = vadd.f32 %v542, %v543
        %v545 = vadd.f32 %v514, %v515
        %v546 = vadd.f32 %v545, %v516
        %v547 = vadd.f32 %v546, %v517
        %v548 = vrot.slane %v547, 4
        %v549 = vadd.f32 %v547, %v548
        %v550 = vrot.slane %v549, 2
        %v551 = vadd.f32 %v549, %v550
        %v552 = vrot.slane %v551, 1
        %v553 = vadd.f32 %v551, %v552
        %v554 = vrsqrt.pop %v526
        %v555 = vmul.f32 %v526, %v554
        %vm556 = vcmp.eq.f32.partialorder %v526, inf
        %v557 = vsel %vm556, %v526, %v555
        %vm558 = vcmp.eq.f32.partialorder %v526, 0.0
        %v559 = vand.u32 %v526, 2147483648
        %v560 = vsel %vm558, %v559, %v557
        %v561 = vrsqrt.pop %v535
        %v562 = vmul.f32 %v535, %v561
        %vm563 = vcmp.eq.f32.partialorder %v535, inf
        %v564 = vsel %vm563, %v535, %v562
        %vm565 = vcmp.eq.f32.partialorder %v535, 0.0
        %v566 = vand.u32 %v535, 2147483648
        %v567 = vsel %vm565, %v566, %v564
        %v568 = vrsqrt.pop %v544
        %v569 = vmul.f32 %v544, %v568
        %vm570 = vcmp.eq.f32.partialorder %v544, inf
        %v571 = vsel %vm570, %v544, %v569
        %vm572 = vcmp.eq.f32.partialorder %v544, 0.0
        %v573 = vand.u32 %v544, 2147483648
        %v574 = vsel %vm572, %v573, %v571
        %v575 = vrsqrt.pop %v553
        %v576 = vmul.f32 %v553, %v575
        %vm577 = vcmp.eq.f32.partialorder %v553, inf
        %v578 = vsel %vm577, %v553, %v576
        %vm579 = vcmp.eq.f32.partialorder %v553, 0.0
        %v580 = vand.u32 %v553, 2147483648
        %v581 = vsel %vm579, %v580, %v578
        %v582 = vsub.f32 0.0, %v560
        %v583 = vsub.f32 0.0, %v567
        %v584 = vsub.f32 0.0, %v574
        %v585 = vsub.f32 0.0, %v581
        %v586 = vmul.f32 %v582, 10.0
        %v587 = vmul.f32 %v583, 10.0
        %v588 = vmul.f32 %v584, 10.0
        %v589 = vmul.f32 %v585, 10.0
        %v590 = vmax.f32 %v586, %v587
        %v591 = vmax.f32 %v588, %v589
        %v592 = vmax.f32 %v590, %v591
        %v593 = vsub.f32 %v586, %v592
        %v594 = vsub.f32 %v587, %v592
        %v595 = vsub.f32 %v588, %v592
        %v596 = vsub.f32 %v589, %v592
        %v597 = vmul.f32 %v593, 1.442695
        %v598 = vpow.pop %v597
        %v599 = vmul.f32 %v594, 1.442695
        %v600 = vpow.pop %v599
        %v601 = vmul.f32 %v595, 1.442695
        %v602 = vpow.pop %v601
        %v603 = vmul.f32 %v596, 1.442695
        %v604 = vpow.pop %v603
        %v609 = vrot.slane %v600, 7
        %vm610 = vcmask 1041409
        %v611 = vsel %vm610, %v609, %v598
        %v612 = vrot.slane %v602, 6
        %vm613 = vcmask 1042434
        %v614 = vsel %vm613, %v612, %v611
        %v615 = vrot.slane %v604, 5
        %vm616 = vcmask 1043459
        %v617 = vsel %vm616, %v615, %v614
        %vm619 = vcmask 1043456
        %v620 = vsel %vm619, %v617, 0.0
        %v621 = vrot.slane %v620, 4
        %v622 = vadd.f32 %v620, %v621
        %v623 = vrot.slane %v622, 2
        %v624 = vadd.f32 %v622, %v623
        %v625 = vrot.slane %v624, 1
        %v626 = vadd.f32 %v624, %v625
        %v627 = vrcp.pop %v626
        %v628 = vlaneseq
        %v629 = vshrl.u32 %v628, 7
        %v630 = vsub.s32 0, %v629
        %v631 = vrot.slane %v627, %v630
        %v632 = vmul.f32 %v598, %v631
        %v633 = vmul.f32 %v600, %v631
        %v634 = vmul.f32 %v602, %v631
        %v635 = vmul.f32 %v604, %v631
        %v636 = vlaneseq
        %v637 = vshrl.u32 %v636, 7
        %v638 = vsub.s32 0, %v637
        %v639 = vrot.slane %v632, %v638
        %v640 = vlaneseq
        %v641 = vshrl.u32 %v640, 7
        %v642 = vsub.s32 0, %v641
        %v643 = vrot.slane %v633, %v642
        %v644 = vlaneseq
        %v645 = vshrl.u32 %v644, 7
        %v646 = vsub.s32 0, %v645
        %v647 = vrot.slane %v634, %v646
        %v648 = vlaneseq
        %v649 = vshrl.u32 %v648, 7
        %v650 = vsub.s32 0, %v649
        %v651 = vrot.slane %v635, %v650
        %v652 = vmul.f32 %v639, %v280
        %v653 = vmul.f32 %v639, %v281
        %v654 = vmul.f32 %v639, %v282
        %v655 = vmul.f32 %v639, %v283
        %v656 = vmul.f32 %v643, %v280
        %v657 = vmul.f32 %v643, %v281
        %v658 = vmul.f32 %v643, %v282
        %v659 = vmul.f32 %v643, %v283
        %v660 = vmul.f32 %v647, %v280
        %v661 = vmul.f32 %v647, %v281
        %v662 = vmul.f32 %v647, %v282
        %v663 = vmul.f32 %v647, %v283
        %v664 = vmul.f32 %v651, %v280
        %v665 = vmul.f32 %v651, %v281
        %v666 = vmul.f32 %v651, %v282
        %v667 = vmul.f32 %v651, %v283
        %v669 = vsel %vm308, %v301, 0
        %v672 = vsel %vm308, %v303, 0
        %v675 = vsel %vm308, %v305, 0
        %v678 = vsel %vm308, %v307, 0
        %680 = vmatprep.subr.mxu0 0.0
        %681 = vmatpush1.msra.mxu0 %v663
        %682 = vmatprep.subr.mxu0 0.0
        %683 = vmatpush1.msra.mxu0 %v662
        %684 = vmatprep.subr.mxu0 0.0
        %685 = vmatpush1.msra.mxu0 %v661
        %686 = vmatprep.subr.mxu0 0.0
        %687 = vmatpush1.msra.mxu0 %v660
        %688 = vmatprep.subr.mxu0 0.0
        %689 = vmatpush1.msra.mxu0 %v659
        %690 = vmatprep.subr.mxu0 0.0
        %691 = vmatpush1.msra.mxu0 %v658
        %692 = vmatprep.subr.mxu0 0.0
        %693 = vmatpush1.msra.mxu0 %v657
        %694 = vmatprep.subr.mxu0 0.0
        %695 = vmatpush1.msra.mxu0 %v656
        %696 = vmatprep.subr.mxu0 0.0
        %697 = vmatpush1.msra.mxu0 %v655
        %698 = vmatprep.subr.mxu0 0.0
        %699 = vmatpush1.msra.mxu0 %v654
        %700 = vmatprep.subr.mxu0 0.0
        %701 = vmatpush1.msra.mxu0 %v653
        %702 = vmatprep.subr.mxu0 0.0
        %703 = vmatpush1.msra.mxu0 %v652
        %704 = vmatprep.subr.mxu0 0.0
        %705 = vmatpush1.msra.mxu0 %v283
        %706 = vmatprep.subr.mxu0 0.0
        %707 = vmatpush1.msra.mxu0 %v282
        %708 = vmatprep.subr.mxu0 0.0
        %709 = vmatpush1.msra.mxu0 %v281
        %710 = vmatprep.subr.mxu0 0.0
        %711 = vmatpush1.msra.mxu0 %v280
        %712 = vmatprep.subr.mxu0 0.0
        %713 = vmatpush2.msra.mxu0 0.0
        %714 = vmatprep.subr.mxu0 0.0
        %715 = vmatpush2.msra.mxu0 0.0
        %716 = vmatprep.subr.mxu0 0.0
        %717 = vmatpush2.msra.mxu0 0.0
        %718 = vmatprep.subr.mxu0 0.0
        %719 = vmatpush2.msra.mxu0 0.0
        %720 = vmatprep.subr.mxu0 0.0
        %721 = vmatpush2.msra.mxu0 0.0
        %722 = vmatprep.subr.mxu0 0.0
        %723 = vmatpush2.msra.mxu0 0.0
        %724 = vmatprep.subr.mxu0 0.0
        %725 = vmatpush2.msra.mxu0 0.0
        %726 = vmatprep.subr.mxu0 0.0
        %727 = vmatpush2.msra.mxu0 0.0
        %728 = vmatprep.subr.mxu0 0.0
        %729 = vmatpush2.msra.mxu0 0.0
        %730 = vmatprep.subr.mxu0 0.0
        %731 = vmatpush2.msra.mxu0 0.0
        %732 = vmatprep.subr.mxu0 0.0
        %733 = vmatpush2.msra.mxu0 0.0
        %734 = vmatprep.subr.mxu0 0.0
        %735 = vmatpush2.msra.mxu0 0.0
        %736 = vmatprep.subr.mxu0 0.0
        %737 = vmatpush2.msra.mxu0 %v667
        %738 = vmatprep.subr.mxu0 0.0
        %739 = vmatpush2.msra.mxu0 %v666
        %740 = vmatprep.subr.mxu0 0.0
        %741 = vmatpush2.msra.mxu0 %v665
        %742 = vmatprep.subr.mxu0 0.0
        %743 = vmatpush2.msra.mxu0 %v664
        %744 = vmatprep.mubr.f32.mxu0 %v669
        %745 = vmatmul.mubr.f32.gmra.mxu0 %v300
        %v746 = vpop.f32.mrf.mxu0
        %v747 = vadd.f32 0.0, %v746
        %v748 = vpop.f32.mrf.mxu0
        %749 = vmatprep.mubr.f32.mxu0 %v672
        %750 = vmatmul.mubr.f32.gmra.mxu0 %v302
        %v751 = vpop.f32.mrf.mxu0
        %v752 = vadd.f32 0.0, %v751
        %v753 = vpop.f32.mrf.mxu0
        %754 = vmatprep.mubr.f32.mxu0 %v675
        %755 = vmatmul.mubr.f32.gmra.mxu0 %v304
        %v756 = vpop.f32.mrf.mxu0
        %v757 = vadd.f32 0.0, %v756
        %v758 = vpop.f32.mrf.mxu0
        %759 = vmatprep.mubr.f32.mxu0 %v678
        %760 = vmatmul.mubr.f32.gmra.mxu0 %v306
        %v761 = vpop.f32.mrf.mxu0
        %v762 = vadd.f32 0.0, %v761
        %v763 = vpop.f32.mrf.mxu0
        %764 = vdwg.mxu0
        %v765 = vmul.f32 %v747, 0.5
        %v766 = vmul.f32 %v752, 0.5
        %v767 = vmul.f32 %v757, 0.5
        %v768 = vmul.f32 %v762, 0.5
        %v769 = vadd.f32 %v280, %v765
        %v770 = vadd.f32 %v281, %v766
        %v771 = vadd.f32 %v282, %v767
        %v772 = vadd.f32 %v283, %v768
        %v773 = vmul.f32 %v769, %v769
        %v774 = vmul.f32 %v770, %v770
        %v775 = vmul.f32 %v771, %v771
        %v776 = vmul.f32 %v772, %v772
        %v777 = vadd.f32 %v773, %v774
        %v778 = vadd.f32 %v777, %v775
        %v779 = vadd.f32 %v778, %v776
        %v780 = vrot.slane %v779, 4
        %v781 = vadd.f32 %v779, %v780
        %v782 = vrot.slane %v781, 2
        %v783 = vadd.f32 %v781, %v782
        %v784 = vrot.slane %v783, 1
        %v785 = vadd.f32 %v783, %v784
        %v786 = vmax.f32 %v785, 1e-30
        %v787 = vrsqrt.pop %v786
        %v788 = vmul.f32 %v769, %v787
        %v789 = vmul.f32 %v770, %v787
        %v790 = vmul.f32 %v771, %v787
        %v791 = vmul.f32 %v772, %v787
        %792 = vst [vmem:[%s257] sm:$0xff] %v788
        %793 = vst [vmem:[%s257 + $0x8] sm:$0xff] %v789
        %794 = vst [vmem:[%s257 + $0x10] sm:$0xff] %v790
        %795 = vst [vmem:[%s257 + $0x18] sm:$0xff] %v791
        %s796 = sand.u32 %s115, 1
        %s797 = scalar_lea.sflag [#allocation4], %s796
        %s798 = sand.u32 %s115, 1
        %s799 = smul.addr %s798, 32
        %s800 = scalar_lea.vmem [#allocation3], %s799
        // Predicated region
        $region75: #{tpu_custom_call.1} parent=65 // pred_check
          %p801 = pneg %p125
        $region76: #{tpu_custom_call.1} parent=65 // pred_check_branch
          %803 = sbr.rel (%p801) target = $region78
        $region77: #{tpu_custom_call.1} parent=65 // pred_region
          %s805 = ssub.s32 512, 512
          %806 = vsyncadd %s797, %s805
          %s807 = smul.addr %s21, 128
          %s808 = scalar_lea.hbm %s3, %s807
          %s809 = sshll.u32 %s800, 4
          %s810 = int_to_ptr.vmem [resolvable:$true] %s809
          %815 = dma.vmem_to_hbm [thread:$0]  %s810, 512, %s808, %s797, 128, 384, 8
        $region78: #{tpu_custom_call.1} parent=65 // pred_fallthru
          _
      $region66: #{tpu_custom_call.1} parent=5 // pred_fallthru
        _
      %p816 = scmp.le.s32.totalorder 2, %s12
      // Predicated region
      $region79: #{tpu_custom_call.1} parent=5 // pred_check
        %p817 = pneg %p816
      $region80: #{tpu_custom_call.1} parent=5 // pred_check_branch
        %819 = sbr.rel (%p817) target = $region82
      $region81: #{tpu_custom_call.1} parent=5 // pred_region
        %s820 = ssub.s32 %s12, 2
        // Predicated region
        $region83: #{tpu_custom_call.1} parent=81 // pred_check
          %p821 = pneg %p131
        $region84: #{tpu_custom_call.1} parent=81 // pred_check_branch
          %823 = sbr.rel (%p821) target = $region86
        $region85: #{tpu_custom_call.1} parent=81 // pred_region
          %s824 = sand.u32 %s116, 1
          %s825 = scalar_lea.sflag [#allocation4], %s824
          %s826 = sand.u32 %s116, 1
          %s827 = smul.addr %s826, 32
          %s828 = scalar_lea.vmem [#allocation3], %s827
          %829 = dma.done %s825, 512
        $region86: #{tpu_custom_call.1} parent=81 // pred_fallthru
          _
      $region82: #{tpu_custom_call.1} parent=5 // pred_fallthru
        _
    $region6: #{tpu_custom_call.1} parent=1 // loop_footer
      %s16 = sadd.s32 1, %s12
    $region7: #{tpu_custom_call.1} parent=1 // loop_footer_branch
      %11 = sbr.rel target = $region3
    $region8: #{tpu_custom_call.1} parent=1 // loop_exit
      _
    %830 = vsyncpa [#allocation4], 1
    %s831 = scalar_lea.sflag [#allocation4], 1
    %832 = vsyncpa %s831, 1

</llo_original>
